<compile_context>
chip_gen: v7x
topology: tpu7x:2x2x1
jax: 0.10.0
libtpu: 0.0.40
codegen_flags: <defaults>
</compile_context>

<pallas_src>
import functools

import jax
import jax.numpy as jnp
from jax.experimental import pallas as pl
from jax.experimental.pallas import tpu as pltpu


def _round_up(x, m):
    return (x + m - 1) // m * m


# ----------------------------- Pallas kernels ------------------------------ #

def _matmul_bias_kernel(a_ref, w_ref, b_ref, o_ref):
    # A[TILE_M, K](bf16) @ W[K, OUTC_pad](bf16) + bias[1, OUTC_pad](f32) -> f32
    o_ref[...] = (jnp.dot(a_ref[...], w_ref[...],
                          preferred_element_type=jnp.float32)
                  + b_ref[...]).astype(o_ref.dtype)


def _deform_combine_kernel(*refs, modulation):
    # Bilinear combine + (optional) modulation fused with the output-conv matmul.
    #   x_* : (TILE_HW, C*N) bf16 gathered corner values (C major, N minor)
    #   g_* : (TILE_HW, N)   f32 bilinear weights (de-duplicated, per pixel / per n)
    #   m   : (TILE_HW, N)   f32 raw modulation logits (sigmoid applied here)
    #   e   : (N, C*N)       f32 0/1 expansion matrix, e[n, f] = (f % N == n)
    #   w   : (C*N, OUTC_pad) bf16 collapsed main-conv weight
    if modulation:
        xlt, xrb, xlb, xrt, glt, grb, glb, grt, m, e, w, o = refs
    else:
        xlt, xrb, xlb, xrt, glt, grb, glb, grt, e, w, o = refs
    e_mat = e[...]

    if modulation:
        # Fold sigmoid(m) into the narrow (T, N) bilinear weights *before* the
        # channel expansion: expand(g)*expand(s) == expand(g*s).  Saves one
        # expansion matmul and a (T, C*N)-wide multiply.
        s = jax.nn.sigmoid(m[...])           # EUP
        g_lt_v, g_rb_v = glt[...] * s, grb[...] * s
        g_lb_v, g_rt_v = glb[...] * s, grt[...] * s
    else:
        g_lt_v, g_rb_v = glt[...], grb[...]
        g_lb_v, g_rt_v = glb[...], grt[...]

    def expand(v):  # (T, N) -> (T, C*N): exact channel broadcast via 0/1 matmul
        return jnp.dot(v, e_mat, preferred_element_type=jnp.float32)

    x_off = (expand(g_lt_v) * xlt[...].astype(jnp.float32)
             + expand(g_rb_v) * xrb[...].astype(jnp.float32)
             + expand(g_lb_v) * xlb[...].astype(jnp.float32)
             + expand(g_rt_v) * xrt[...].astype(jnp.float32))
    o[...] = jnp.dot(x_off.astype(w.dtype), w[...],
                     preferred_element_type=jnp.float32).astype(o.dtype)


# ------------------------------- JAX glue ---------------------------------- #

def conv2d_nhwc_pallas(x_nhwc, w_oihw, bias, ks, padding, stride, tile_m=512):
    """Conv via im2col + M-tiled Pallas matmul.  Returns NHWC output (f32)."""
    b, h, w, c = x_nhwc.shape
    outc = w_oihw.shape[0]
    xp = x_nhwc
    if padding:
        xp = jnp.pad(x_nhwc, ((0, 0), (padding, padding), (padding, padding), (0, 0)))
    h_out = (h + 2 * padding - ks) // stride + 1
    w_out = (w + 2 * padding - ks) // stride + 1
    cols = []
    for i in range(ks):
        for j in range(ks):
            cols.append(xp[:, i:i + stride * h_out:stride,
                            j:j + stride * w_out:stride, :])
    col = jnp.stack(cols, axis=-1)                       # (b, ho, wo, c, ks*ks)
    K = c * ks * ks
    M = b * h_out * w_out
    col = col.reshape(M, K).astype(jnp.bfloat16)         # K index = c*ks*ks + kh*ks + kw

    outc_pad = _round_up(outc, 128)                      # lane-dense output slab
    wf = w_oihw.reshape(outc, K).T                       # (K, outc), same K ordering
    wf = jnp.pad(wf, ((0, 0), (0, outc_pad - outc))).astype(jnp.bfloat16)
    if bias is None:
        bias = jnp.zeros((outc,), jnp.float32)
    bias2 = jnp.pad(bias.astype(jnp.float32), (0, outc_pad - outc)).reshape(1, outc_pad)

    tm = tile_m if M >= tile_m else _round_up(M, 16)
    M_pad = _round_up(M, tm)
    if M_pad != M:
        col = jnp.pad(col, ((0, M_pad - M), (0, 0)))

    out = pl.pallas_call(
        _matmul_bias_kernel,
        out_shape=jax.ShapeDtypeStruct((M_pad, outc_pad), jnp.float32),
        grid=(M_pad // tm,),
        in_specs=[pl.BlockSpec((tm, K), lambda i: (i, 0)),
                  pl.BlockSpec((K, outc_pad), lambda i: (0, 0)),
                  pl.BlockSpec((1, outc_pad), lambda i: (0, 0))],
        out_specs=pl.BlockSpec((tm, outc_pad), lambda i: (i, 0)),
        compiler_params=pltpu.CompilerParams(dimension_semantics=("parallel",)),
    )(col, wf, bias2)
    return out[:M, :outc].reshape(b, h_out, w_out, outc)


def deform_conv2d_forward(x, params, ks=3, padding=1, stride=1, modulation=True,
                          tile_hw=512):
    b, c, h, w = x.shape
    N = ks * ks
    outc = params["conv_w"].shape[0]

    x_nhwc = jnp.transpose(x, (0, 2, 3, 1))              # single layout change

    # ---- fused offset (+ modulation) generating conv ---------------------- #
    if modulation:
        w_gen = jnp.concatenate([params["p_w"], params["m_w"]], axis=0)   # (3N, c, 3, 3)
        b_gen = jnp.concatenate([params["p_b"], params["m_b"]], axis=0)
    else:
        w_gen, b_gen = params["p_w"], params["p_b"]
    gen = conv2d_nhwc_pallas(x_nhwc, w_gen, b_gen, 3, 1, stride)          # (b, ho, wo, 2N[+N])
    offset = gen[..., :2 * N]
    h_out, w_out = offset.shape[1], offset.shape[2]
    HW = h_out * w_out

    # ---- sampling positions p = p_0 + p_n + offset  (b, ho, wo, 2N) ------- #
    r = jnp.arange(-(ks - 1) // 2, (ks - 1) // 2 + 1, dtype=jnp.float32)
    pnx, pny = jnp.meshgrid(r, r, indexing="ij")
    p_n = jnp.concatenate([pnx.reshape(-1), pny.reshape(-1)]).reshape(1, 1, 1, 2 * N)
    p0x = jnp.arange(1, h_out * stride + 1, stride, dtype=jnp.float32)
    p0y = jnp.arange(1, w_out * stride + 1, stride, dtype=jnp.float32)
    p_0 = jnp.concatenate(
        [jnp.broadcast_to(p0x[None, :, None, None], (1, h_out, w_out, N)),
         jnp.broadcast_to(p0y[None, None, :, None], (1, h_out, w_out, N))], axis=-1)
    p = p_0 + p_n + offset

    xp = x_nhwc
    if padding:
        xp = jnp.pad(x_nhwc, ((0, 0), (padding, padding), (padding, padding), (0, 0)))
    Hp, Wp = xp.shape[1], xp.shape[2]

    def clamp2(q):
        return jnp.concatenate([jnp.clip(q[..., :N], 0, Hp - 1),
                                jnp.clip(q[..., N:], 0, Wp - 1)], axis=-1)

    q_floor = jnp.floor(p)
    q_lt = clamp2(q_floor).astype(jnp.int32)
    q_rb = clamp2(q_floor + 1).astype(jnp.int32)
    q_lb = jnp.concatenate([q_lt[..., :N], q_rb[..., N:]], axis=-1)
    q_rt = jnp.concatenate([q_rb[..., :N], q_lt[..., N:]], axis=-1)
    p_c = clamp2(p)

    # NOTE: like the PyTorch reference, bilinear weights may leave [0,1] when p is
    # clamped but a corner is not — intentional, matches reference semantics.
    def bil_w(q, sx, sy):
        qf = q.astype(p_c.dtype)
        return ((1 + sx * (qf[..., :N] - p_c[..., :N]))
                * (1 + sy * (qf[..., N:] - p_c[..., N:])))

    g_lt = bil_w(q_lt, 1.0, 1.0)
    g_rb = bil_w(q_rb, -1.0, -1.0)
    g_lb = bil_w(q_lb, 1.0, -1.0)
    g_rt = bil_w(q_rt, -1.0, 1.0)

    # ---- corner gather straight into (b, HW, C*N) (C major), bf16 --------- #
    # TODO(synk): replace the XLA gather with an in-kernel DMA gather
    # (x_pad kept in HBM via pl.ANY + PrefetchScalarGridSpec indices) so the four
    # corner tensors are never materialized in HBM.
    x_flat = xp.astype(jnp.bfloat16).reshape(b, Hp * Wp * c)
    c_off = jnp.arange(c, dtype=jnp.int32)[None, None, :, None]

    def gather_corner(q):                                 # q: (b, ho, wo, 2N) int32
        sp = (q[..., :N] * Wp + q[..., N:]).reshape(b, HW, 1, N)
        idx = (sp * c + c_off).reshape(b, HW * c * N)
        vals = jnp.take_along_axis(x_flat, idx, axis=1)
        return vals.reshape(b, HW, c * N)                 # feature f = cc*N + n

    x_q_lt, x_q_rb = gather_corner(q_lt), gather_corner(q_rb)
    x_q_lb, x_q_rt = gather_corner(q_lb), gather_corner(q_rt)

    # ---- combine + collapsed main conv (Pallas, tiled over batch x HW) ---- #
    CN = c * N
    outc_pad = _round_up(outc, 128)
    w_main = params["conv_w"].reshape(outc, CN).T                 # (CN, outc), C major
    w_main = jnp.pad(w_main, ((0, 0), (0, outc_pad - outc))).astype(jnp.bfloat16)
    e_mat = (jnp.arange(CN)[None, :] % N ==
             jnp.arange(N)[:, None]).astype(jnp.float32)          # (N, CN) 0/1

    t_hw = tile_hw if HW >= tile_hw else _round_up(HW, 16)
    HW_pad = _round_up(HW, t_hw)

    def flat_hw(a, feat):
        a = a.reshape(b, HW, feat)
        if HW_pad != HW:
            a = jnp.pad(a, ((0, 0), (0, HW_pad - HW), (0, 0)))
        return a

    x_args = [flat_hw(xq, CN) for xq in (x_q_lt, x_q_rb, x_q_lb, x_q_rt)]
    g_args = [flat_hw(g.astype(jnp.float32), N) for g in (g_lt, g_rb, g_lb, g_rt)]

    x_spec = pl.BlockSpec((None, t_hw, CN), lambda ib, ih: (ib, ih, 0))
    g_spec = pl.BlockSpec((None, t_hw, N), lambda ib, ih: (ib, ih, 0))
    e_spec = pl.BlockSpec((N, CN), lambda ib, ih: (0, 0))
    w_spec = pl.BlockSpec((CN, outc_pad), lambda ib, ih: (0, 0))
    o_spec = pl.BlockSpec((None, t_hw, outc_pad), lambda ib, ih: (ib, ih, 0))

    operands = x_args + g_args
    in_specs = [x_spec] * 4 + [g_spec] * 4
    if modulation:
        operands.append(flat_hw(gen[..., 2 * N:].astype(jnp.float32), N))
        in_specs.append(g_spec)
    operands += [e_mat, w_main]
    in_specs += [e_spec, w_spec]

    out = pl.pallas_call(
        functools.partial(_deform_combine_kernel, modulation=modulation),
        out_shape=jax.ShapeDtypeStruct((b, HW_pad, outc_pad), jnp.float32),
        grid=(b, HW_pad // t_hw),
        in_specs=in_specs,
        out_specs=o_spec,
        compiler_params=pltpu.CompilerParams(
            dimension_semantics=("parallel", "parallel")),
    )(*operands)

    out = out[:, :HW, :outc].reshape(b, h_out, w_out, outc)
    return jnp.transpose(out, (0, 3, 1, 2))               # NCHW, like the module


# --------------------- pure-JAX f32 reference (verification) --------------- #

def _reference_forward(x, params, ks=3, padding=1, stride=1, modulation=True):
    b, c, h, w = x.shape
    N = ks * ks
    outc = params["conv_w"].shape[0]

    def conv(xi, wi, bi, pad, st):
        out = jax.lax.conv_general_dilated(
            xi, wi, (st, st), [(pad, pad), (pad, pad)],
            dimension_numbers=("NCHW", "OIHW", "NCHW"))
        return out + bi.reshape(1, -1, 1, 1)

    offset = conv(x, params["p_w"], params["p_b"], 1, stride)
    if modulation:
        m = jax.nn.sigmoid(conv(x, params["m_w"], params["m_b"], 1, stride))
    ho, wo = offset.shape[2], offset.shape[3]
    xp = jnp.pad(x, ((0, 0), (0, 0), (padding, padding), (padding, padding))) if padding else x
    Hp, Wp = xp.shape[2], xp.shape[3]

    r = jnp.arange(-(ks - 1) // 2, (ks - 1) // 2 + 1, dtype=jnp.float32)
    pnx, pny = jnp.meshgrid(r, r, indexing="ij")
    p_n = jnp.concatenate([pnx.reshape(-1), pny.reshape(-1)]).reshape(1, 2 * N, 1, 1)
    p0x = jnp.arange(1, ho * stride + 1, stride, dtype=jnp.float32)
    p0y = jnp.arange(1, wo * stride + 1, stride, dtype=jnp.float32)
    P0X, P0Y = jnp.meshgrid(p0x, p0y, indexing="ij")
    p_0 = jnp.concatenate([jnp.tile(P0X.reshape(1, 1, ho, wo), (1, N, 1, 1)),
                           jnp.tile(P0Y.reshape(1, 1, ho, wo), (1, N, 1, 1))], axis=1)
    p = jnp.transpose(p_0 + p_n + offset, (0, 2, 3, 1))

    def cl(q):
        return jnp.concatenate([jnp.clip(q[..., :N], 0, Hp - 1),
                                jnp.clip(q[..., N:], 0, Wp - 1)], axis=-1)

    qf = jnp.floor(p)
    q_lt = cl(qf).astype(jnp.int32)
    q_rb = cl(qf + 1).astype(jnp.int32)
    q_lb = jnp.concatenate([q_lt[..., :N], q_rb[..., N:]], axis=-1)
    q_rt = jnp.concatenate([q_rb[..., :N], q_lt[..., N:]], axis=-1)
    p = cl(p)

    def g(q, sx, sy):
        qq = q.astype(jnp.float32)
        return ((1 + sx * (qq[..., :N] - p[..., :N]))
                * (1 + sy * (qq[..., N:] - p[..., N:])))

    g_lt, g_rb = g(q_lt, 1.0, 1.0), g(q_rb, -1.0, -1.0)
    g_lb, g_rt = g(q_lb, 1.0, -1.0), g(q_rt, -1.0, 1.0)

    x_flat = xp.reshape(b, c, Hp * Wp)

    def gx(q):
        idx = (q[..., :N] * Wp + q[..., N:]).reshape(b, 1, ho * wo * N)
        idx = jnp.broadcast_to(idx, (b, c, ho * wo * N))
        return jnp.take_along_axis(x_flat, idx, axis=-1).reshape(b, c, ho, wo, N)

    x_off = (g_lt[:, None] * gx(q_lt) + g_rb[:, None] * gx(q_rb)
             + g_lb[:, None] * gx(q_lb) + g_rt[:, None] * gx(q_rt))
    if modulation:
        x_off = x_off * jnp.transpose(m, (0, 2, 3, 1))[:, None]
    # kernel=ks, stride=ks conv over the reshaped x_offset == per-pixel contraction
    return jnp.einsum("bchwn,ocn->bohw", x_off,
                      params["conv_w"].reshape(outc, c, N))


# --------------------------------- main ------------------------------------ #

if __name__ == "__main__":
    key = jax.random.PRNGKey(0)
    k1, k2, k3, k4 = jax.random.split(key, 4)
    B, INC, H, W = 2, 4, 16, 16
    OUTC, KS = 8, 3
    N = KS * KS

    x = jax.random.normal(k1, (B, INC, H, W), jnp.float32)
    params = {
        # p_conv / m_conv weights zero-initialized as in the module's __init__;
        # their biases (PyTorch default random init) set deterministically here.
        "p_w": jnp.zeros((2 * N, INC, 3, 3), jnp.float32),
        "p_b": jax.random.uniform(k2, (2 * N,), jnp.float32, -0.5, 0.5),
        "m_w": jnp.zeros((N, INC, 3, 3), jnp.float32),
        "m_b": jax.random.uniform(k3, (N,), jnp.float32, -0.5, 0.5),
        # main conv created with bias=None in the module -> no bias term.
        "conv_w": 0.1 * jax.random.normal(k4, (OUTC, INC, KS, KS), jnp.float32),
    }

    out = deform_conv2d_forward(x, params, ks=KS, padding=1, stride=1, modulation=True)
    out = jax.block_until_ready(out)
    assert out.shape == (B, OUTC, H, W), out.shape

    ref = _reference_forward(x, params, ks=KS, padding=1, stride=1, modulation=True)
    err = float(jnp.max(jnp.abs(out - ref)))
    assert err < 1e-1, f"max abs err {err}"
    print("KERNEL_OK")
</pallas_src>

<mosaic_0001>
module attributes {stable_mosaic.version = 11 : i64} {
  func.func @_matmul_bias_kernel(%arg0: i32, %arg1: memref<512x36xbf16, #tpu.memory_space<vmem>>, %arg2: memref<36x128xbf16, #tpu.memory_space<vmem>>, %arg3: memref<1x128xf32, #tpu.memory_space<vmem>>, %arg4: memref<512x128xf32, #tpu.memory_space<vmem>>) attributes {dimension_semantics = [#tpu.dimension_semantics<parallel>], iteration_bounds = array<i64: 1>, scalar_prefetch = 0 : i64, scratch_operands = 0 : i64, tpu.core_type = #tpu.core_type<tc>, window_params = [{transform_indices = @transform_0, window_bounds = array<i64: 512, 36>}, {pipeline_mode = #tpu.pipeline_mode<synchronous>, transform_indices = @transform_1, window_bounds = array<i64: 36, 128>}, {pipeline_mode = #tpu.pipeline_mode<synchronous>, transform_indices = @transform_2, window_bounds = array<i64: 1, 128>}, {transform_indices = @transform_3, window_bounds = array<i64: 512, 128>}]} {
    %c0 = arith.constant 0 : index
    %c0_0 = arith.constant 0 : index
    %0 = vector.load %arg1[%c0, %c0_0] : memref<512x36xbf16, #tpu.memory_space<vmem>>, vector<512x36xbf16>
    %c0_1 = arith.constant 0 : index
    %c0_2 = arith.constant 0 : index
    %1 = vector.load %arg2[%c0_1, %c0_2] : memref<36x128xbf16, #tpu.memory_space<vmem>>, vector<36x128xbf16>
    %cst = arith.constant dense<0.000000e+00> : vector<512x128xf32>
    %2 = tpu.matmul %0, %1, %cst {dimension_numbers = #tpu.dot_dimension_numbers<[1], [0], [0], [1], [0, 0, 1, 1], [], []>} : vector<512x36xbf16>, vector<36x128xbf16>, vector<512x128xf32> -> vector<512x128xf32>
    %c0_3 = arith.constant 0 : index
    %c0_4 = arith.constant 0 : index
    %3 = vector.load %arg3[%c0_3, %c0_4] : memref<1x128xf32, #tpu.memory_space<vmem>>, vector<1x128xf32>
    %4 = vector.broadcast %3 : vector<1x128xf32> to vector<512x128xf32>
    %5 = arith.addf %2, %4 : vector<512x128xf32>
    %c0_5 = arith.constant 0 : index
    %c0_6 = arith.constant 0 : index
    %6 = vector.load %arg4[%c0_5, %c0_6] : memref<512x128xf32, #tpu.memory_space<vmem>>, vector<512x128xf32>
    tpu.vector_store %arg4[%c0_5, %c0_6], %5 {strides = array<i32>} : memref<512x128xf32, #tpu.memory_space<vmem>>, vector<512x128xf32>,
    return
  }
  func.func @transform_0(%arg0: i32) -> (i32, i32) {
    %c0_i32 = arith.constant 0 : i32
    %c0_i32_0 = arith.constant 0 : i32
    return %arg0, %c0_i32 : i32, i32
  }
  func.func @transform_1(%arg0: i32) -> (i32, i32) {
    %c0_i32 = arith.constant 0 : i32
    %c0_i32_0 = arith.constant 0 : i32
    %c0_i32_1 = arith.constant 0 : i32
    return %c0_i32, %c0_i32_0 : i32, i32
  }
  func.func @transform_2(%arg0: i32) -> (i32, i32) {
    %c0_i32 = arith.constant 0 : i32
    %c0_i32_0 = arith.constant 0 : i32
    %c0_i32_1 = arith.constant 0 : i32
    return %c0_i32, %c0_i32_0 : i32, i32
  }
  func.func @transform_3(%arg0: i32) -> (i32, i32) {
    %c0_i32 = arith.constant 0 : i32
    %c0_i32_0 = arith.constant 0 : i32
    return %arg0, %c0_i32 : i32, i32
  }
}

</mosaic_0001>

<llo_original>
// kernel: tpu_custom_call.1
$region0: #{tpu_custom_call.1}
  #allocation0 [shape = 'u32[]', space=smem, size = 0x4, offset = 0x4, fixed_abs, tag = 'smem constant byte address 0x4 - core index']
  #allocation1 [shape = 'u32[144,128]{1,0:T(1,128)}', space=vmem, size = 0x12000, scoped, tag = 'internal scratch']
  %s0 = inlined_call_operand.vmem [shape: bf16[512,36], index: 0, kind: input, shape index: {}]
  %s1 = inlined_call_operand.vmem [shape: bf16[36,128], index: 1, kind: input, shape index: {}]
  %s2 = inlined_call_operand.vmem [shape: f32[1,128], index: 2, kind: input, shape index: {}]
  %s3 = inlined_call_operand.hbm [shape: f32[512,128], index: 3, kind: output, shape index: {}]
  %s4 = sld [smem:[#allocation0]]
  $region22: #{tpu_custom_call.1} parent=0
    _
  %s6 = ssub.s32 1, %s4
  %s7 = scalar_select 0, %s6, %s4
  $region1: #{tpu_custom_call.1} parent=0
    #allocation2 [shape = 'u8[262144]{0}', space=vmem, size = 0x40000, scoped, tag = 'output window, operand 0, single buffered']
    #allocation3 [shape = 's32[1]{0}', space=sflag, size = 0x4, scoped, tag = 'scoped memory for tpu_custom_call.1']
    %8 = vsyncpa [#allocation3], 0
    // Predicated region
    $region2: #{tpu_custom_call.1} parent=1 // pred_check
      _
    $region3: #{tpu_custom_call.1} parent=1 // pred_check_branch
      %10 = sbr.rel (0) target = $region5
    $region4: #{tpu_custom_call.1} parent=1 // pred_region
      _
    $region5: #{tpu_custom_call.1} parent=1 // pred_fallthru
      _
    // Predicated region
    $region6: #{tpu_custom_call.1} parent=1 // pred_check
      _
    $region7: #{tpu_custom_call.1} parent=1 // pred_check_branch
      %12 = sbr.rel (0) target = $region9
    $region8: #{tpu_custom_call.1} parent=1 // pred_region
      _
    $region9: #{tpu_custom_call.1} parent=1 // pred_fallthru
      _
    // Predicated region
    $region10: #{tpu_custom_call.1} parent=1 // pred_check
      _
    $region11: #{tpu_custom_call.1} parent=1 // pred_check_branch
      %14 = sbr.rel (0) target = $region13
    $region12: #{tpu_custom_call.1} parent=1 // pred_region
      _
    $region13: #{tpu_custom_call.1} parent=1 // pred_fallthru
      _
    %v16 = vld [vmem:[%s0] sm:$0xf]
    %v17 = vld [vmem:[%s0 + $0x4] sm:$0xf]
    %v18 = vld [vmem:[%s0 + $0x8] sm:$0xf]
    %v19 = vld [vmem:[%s0 + $0xc] sm:$0xf]
    %v20 = vld [vmem:[%s0 + $0x10] sm:$0xf]
    %v21 = vld [vmem:[%s0 + $0x14] sm:$0xf]
    %v22 = vld [vmem:[%s0 + $0x18] sm:$0xf]
    %v23 = vld [vmem:[%s0 + $0x1c] sm:$0xf]
    %v24 = vld [vmem:[%s0 + $0x20] sm:$0xf]
    %v25 = vld [vmem:[%s0 + $0x24] sm:$0xf]
    %v26 = vld [vmem:[%s0 + $0x28] sm:$0xf]
    %v27 = vld [vmem:[%s0 + $0x2c] sm:$0xf]
    %v28 = vld [vmem:[%s0 + $0x30] sm:$0xf]
    %v29 = vld [vmem:[%s0 + $0x34] sm:$0xf]
    %v30 = vld [vmem:[%s0 + $0x38] sm:$0xf]
    %v31 = vld [vmem:[%s0 + $0x3c] sm:$0xf]
    %v32 = vld [vmem:[%s0 + $0x40] sm:$0xf]
    %v33 = vld [vmem:[%s0 + $0x44] sm:$0xf]
    %v34 = vld [vmem:[%s0 + $0x48] sm:$0xf]
    %v35 = vld [vmem:[%s0 + $0x4c] sm:$0xf]
    %v36 = vld [vmem:[%s0 + $0x50] sm:$0xf]
    %v37 = vld [vmem:[%s0 + $0x54] sm:$0xf]
    %v38 = vld [vmem:[%s0 + $0x58] sm:$0xf]
    %v39 = vld [vmem:[%s0 + $0x5c] sm:$0xf]
    %v40 = vld [vmem:[%s0 + $0x60] sm:$0xf]
    %v41 = vld [vmem:[%s0 + $0x64] sm:$0xf]
    %v42 = vld [vmem:[%s0 + $0x68] sm:$0xf]
    %v43 = vld [vmem:[%s0 + $0x6c] sm:$0xf]
    %v44 = vld [vmem:[%s0 + $0x70] sm:$0xf]
    %v45 = vld [vmem:[%s0 + $0x74] sm:$0xf]
    %v46 = vld [vmem:[%s0 + $0x78] sm:$0xf]
    %v47 = vld [vmem:[%s0 + $0x7c] sm:$0xf]
    %v48 = vld [vmem:[%s0 + $0x80] sm:$0xf]
    %v49 = vld [vmem:[%s0 + $0x84] sm:$0xf]
    %v50 = vld [vmem:[%s0 + $0x88] sm:$0xf]
    %v51 = vld [vmem:[%s0 + $0x8c] sm:$0xf]
    %v52 = vld [vmem:[%s0 + $0x90] sm:$0xf]
    %v53 = vld [vmem:[%s0 + $0x94] sm:$0xf]
    %v54 = vld [vmem:[%s0 + $0x98] sm:$0xf]
    %v55 = vld [vmem:[%s0 + $0x9c] sm:$0xf]
    %v56 = vld [vmem:[%s0 + $0xa0] sm:$0xf]
    %v57 = vld [vmem:[%s0 + $0xa4] sm:$0xf]
    %v58 = vld [vmem:[%s0 + $0xa8] sm:$0xf]
    %v59 = vld [vmem:[%s0 + $0xac] sm:$0xf]
    %v60 = vld [vmem:[%s0 + $0xb0] sm:$0xf]
    %v61 = vld [vmem:[%s0 + $0xb4] sm:$0xf]
    %v62 = vld [vmem:[%s0 + $0xb8] sm:$0xf]
    %v63 = vld [vmem:[%s0 + $0xbc] sm:$0xf]
    %v64 = vld [vmem:[%s0 + $0xc0] sm:$0xf]
    %v65 = vld [vmem:[%s0 + $0xc4] sm:$0xf]
    %v66 = vld [vmem:[%s0 + $0xc8] sm:$0xf]
    %v67 = vld [vmem:[%s0 + $0xcc] sm:$0xf]
    %v68 = vld [vmem:[%s0 + $0xd0] sm:$0xf]
    %v69 = vld [vmem:[%s0 + $0xd4] sm:$0xf]
    %v70 = vld [vmem:[%s0 + $0xd8] sm:$0xf]
    %v71 = vld [vmem:[%s0 + $0xdc] sm:$0xf]
    %v72 = vld [vmem:[%s0 + $0xe0] sm:$0xf]
    %v73 = vld [vmem:[%s0 + $0xe4] sm:$0xf]
    %v74 = vld [vmem:[%s0 + $0xe8] sm:$0xf]
    %v75 = vld [vmem:[%s0 + $0xec] sm:$0xf]
    %v76 = vld [vmem:[%s0 + $0xf0] sm:$0xf]
    %v77 = vld [vmem:[%s0 + $0xf4] sm:$0xf]
    %v78 = vld [vmem:[%s0 + $0xf8] sm:$0xf]
    %v79 = vld [vmem:[%s0 + $0xfc] sm:$0xf]
    %v80 = vld [vmem:[%s1] sm:$0xf]
    %v81 = vld [vmem:[%s1 + $0x4] sm:$0xf]
    %v82 = vld [vmem:[%s1 + $0x8] sm:$0xf]
    %v83 = vld [vmem:[%s1 + $0xc] sm:$0xf]
    %v84 = vld [vmem:[%s1 + $0x10] sm:$0x3]
    %v85 = vld [vmem:[%s2] sm:$0x1]
    %v87 = vlaneseq
    %v88 = vshrl.u32 %v87, 7
    %v89 = vsub.s32 0, %v88
    %v90 = vrot.slane %v85, %v89
    %v156 = vunpack.c.l.b16 %v16
    %v157 = vunpack.c.l.b16 %v17
    %v158 = vunpack.c.l.b16 %v18
    %v159 = vunpack.c.l.b16 %v19
    %v160 = vunpack.c.l.b16 %v20
    %v161 = vunpack.c.l.b16 %v21
    %v162 = vunpack.c.l.b16 %v22
    %v163 = vunpack.c.l.b16 %v23
    %v164 = vunpack.c.l.b16 %v24
    %v165 = vunpack.c.l.b16 %v25
    %v166 = vunpack.c.l.b16 %v26
    %v167 = vunpack.c.l.b16 %v27
    %v168 = vunpack.c.l.b16 %v28
    %v169 = vunpack.c.l.b16 %v29
    %v170 = vunpack.c.l.b16 %v30
    %v171 = vunpack.c.l.b16 %v31
    %v172 = vunpack.c.l.b16 %v32
    %v173 = vunpack.c.l.b16 %v33
    %v174 = vunpack.c.l.b16 %v34
    %v175 = vunpack.c.l.b16 %v35
    %v176 = vunpack.c.l.b16 %v36
    %v177 = vunpack.c.l.b16 %v37
    %v178 = vunpack.c.l.b16 %v38
    %v179 = vunpack.c.l.b16 %v39
    %v180 = vunpack.c.l.b16 %v40
    %v181 = vunpack.c.l.b16 %v41
    %v182 = vunpack.c.l.b16 %v42
    %v183 = vunpack.c.l.b16 %v43
    %v184 = vunpack.c.l.b16 %v44
    %v185 = vunpack.c.l.b16 %v45
    %v186 = vunpack.c.l.b16 %v46
    %v187 = vunpack.c.l.b16 %v47
    %v188 = vunpack.c.l.b16 %v48
    %v189 = vunpack.c.l.b16 %v49
    %v190 = vunpack.c.l.b16 %v50
    %v191 = vunpack.c.l.b16 %v51
    %v192 = vunpack.c.l.b16 %v52
    %v193 = vunpack.c.l.b16 %v53
    %v194 = vunpack.c.l.b16 %v54
    %v195 = vunpack.c.l.b16 %v55
    %v196 = vunpack.c.l.b16 %v56
    %v197 = vunpack.c.l.b16 %v57
    %v198 = vunpack.c.l.b16 %v58
    %v199 = vunpack.c.l.b16 %v59
    %v200 = vunpack.c.l.b16 %v60
    %v201 = vunpack.c.l.b16 %v61
    %v202 = vunpack.c.l.b16 %v62
    %v203 = vunpack.c.l.b16 %v63
    %v204 = vunpack.c.l.b16 %v64
    %v205 = vunpack.c.l.b16 %v65
    %v206 = vunpack.c.l.b16 %v66
    %v207 = vunpack.c.l.b16 %v67
    %v208 = vunpack.c.l.b16 %v68
    %v209 = vunpack.c.l.b16 %v69
    %v210 = vunpack.c.l.b16 %v70
    %v211 = vunpack.c.l.b16 %v71
    %v212 = vunpack.c.l.b16 %v72
    %v213 = vunpack.c.l.b16 %v73
    %v214 = vunpack.c.l.b16 %v74
    %v215 = vunpack.c.l.b16 %v75
    %v216 = vunpack.c.l.b16 %v76
    %v217 = vunpack.c.l.b16 %v77
    %v218 = vunpack.c.l.b16 %v78
    %v219 = vunpack.c.l.b16 %v79
    %v220 = vpack.c.b16 %v157, %v156
    %v221 = vpack.c.b16 %v159, %v158
    %v222 = vpack.c.b16 %v161, %v160
    %v223 = vpack.c.b16 %v163, %v162
    %v224 = vpack.c.b16 %v165, %v164
    %v225 = vpack.c.b16 %v167, %v166
    %v226 = vpack.c.b16 %v169, %v168
    %v227 = vpack.c.b16 %v171, %v170
    %v228 = vpack.c.b16 %v173, %v172
    %v229 = vpack.c.b16 %v175, %v174
    %v230 = vpack.c.b16 %v177, %v176
    %v231 = vpack.c.b16 %v179, %v178
    %v232 = vpack.c.b16 %v181, %v180
    %v233 = vpack.c.b16 %v183, %v182
    %v234 = vpack.c.b16 %v185, %v184
    %v235 = vpack.c.b16 %v187, %v186
    %v236 = vpack.c.b16 %v189, %v188
    %v237 = vpack.c.b16 %v191, %v190
    %v238 = vpack.c.b16 %v193, %v192
    %v239 = vpack.c.b16 %v195, %v194
    %v240 = vpack.c.b16 %v197, %v196
    %v241 = vpack.c.b16 %v199, %v198
    %v242 = vpack.c.b16 %v201, %v200
    %v243 = vpack.c.b16 %v203, %v202
    %v244 = vpack.c.b16 %v205, %v204
    %v245 = vpack.c.b16 %v207, %v206
    %v246 = vpack.c.b16 %v209, %v208
    %v247 = vpack.c.b16 %v211, %v210
    %v248 = vpack.c.b16 %v213, %v212
    %v249 = vpack.c.b16 %v215, %v214
    %v250 = vpack.c.b16 %v217, %v216
    %v251 = vpack.c.b16 %v219, %v218
    %v257 = vunpack.c.l.b16 %v80
    %v258 = vunpack.c.l.b16 %v81
    %v259 = vunpack.c.l.b16 %v82
    %v260 = vunpack.c.l.b16 %v83
    %v261 = vunpack.c.l.b16 %v84
    %v262 = vpack.c.b16 %v258, %v257
    %v263 = vpack.c.b16 %v260, %v259
    %v264 = vpack.c.b16 %v261, %v261
    %vm267 = vcmask 293888
    %v269 = vsel %vm267, %v220, 0
    %v272 = vsel %vm267, %v221, 0
    %v275 = vsel %vm267, %v222, 0
    %v278 = vsel %vm267, %v223, 0
    %v281 = vsel %vm267, %v224, 0
    %v284 = vsel %vm267, %v225, 0
    %v287 = vsel %vm267, %v226, 0
    %v290 = vsel %vm267, %v227, 0
    %v293 = vsel %vm267, %v228, 0
    %v296 = vsel %vm267, %v229, 0
    %v299 = vsel %vm267, %v230, 0
    %v302 = vsel %vm267, %v231, 0
    %v305 = vsel %vm267, %v232, 0
    %v308 = vsel %vm267, %v233, 0
    %v311 = vsel %vm267, %v234, 0
    %v314 = vsel %vm267, %v235, 0
    %v317 = vsel %vm267, %v236, 0
    %v320 = vsel %vm267, %v237, 0
    %v323 = vsel %vm267, %v238, 0
    %v326 = vsel %vm267, %v239, 0
    %v329 = vsel %vm267, %v240, 0
    %v332 = vsel %vm267, %v241, 0
    %v335 = vsel %vm267, %v242, 0
    %v338 = vsel %vm267, %v243, 0
    %v341 = vsel %vm267, %v244, 0
    %v344 = vsel %vm267, %v245, 0
    %v347 = vsel %vm267, %v246, 0
    %v350 = vsel %vm267, %v247, 0
    %v353 = vsel %vm267, %v248, 0
    %v356 = vsel %vm267, %v249, 0
    %v359 = vsel %vm267, %v250, 0
    %v362 = vsel %vm267, %v251, 0
    %vm364 = vcmask 1041408
    %v366 = vsel %vm364, %v264, 0
    %368 = vmatprep.subr.bf16.mxu0 0
    %369 = vmatpush1.bf16.msra.mxu0 %v262
    %370 = vmatprep.subr.bf16.mxu0 0
    %371 = vmatpush1.bf16.msra.mxu0 %v263
    %372 = vmatprep.subr.bf16.mxu0 0
    %373 = vmatpush1.bf16.msra.mxu0 %v366
    %374 = vmatprep.subr.bf16.mxu0 0
    %375 = vmatpush1.bf16.msra.mxu0 0
    %376 = vmatprep.subr.bf16.mxu0 0
    %377 = vmatpush1.bf16.msra.mxu0 0
    %378 = vmatprep.subr.bf16.mxu0 0
    %379 = vmatpush1.bf16.msra.mxu0 0
    %380 = vmatprep.subr.bf16.mxu0 0
    %381 = vmatpush1.bf16.msra.mxu0 0
    %382 = vmatprep.subr.bf16.mxu0 0
    %383 = vmatpush1.bf16.msra.mxu0 0
    %384 = vmatprep.subr.bf16.mxu0 0
    %385 = vmatpush1.bf16.msra.mxu0 0
    %386 = vmatprep.subr.bf16.mxu0 0
    %387 = vmatpush1.bf16.msra.mxu0 0
    %388 = vmatprep.subr.bf16.mxu0 0
    %389 = vmatpush1.bf16.msra.mxu0 0
    %390 = vmatprep.subr.bf16.mxu0 0
    %391 = vmatpush1.bf16.msra.mxu0 0
    %392 = vmatprep.subr.bf16.mxu0 0
    %393 = vmatpush1.bf16.msra.mxu0 0
    %394 = vmatprep.subr.bf16.mxu0 0
    %395 = vmatpush1.bf16.msra.mxu0 0
    %396 = vmatprep.subr.bf16.mxu0 0
    %397 = vmatpush1.bf16.msra.mxu0 0
    %398 = vmatprep.subr.bf16.mxu0 0
    %399 = vmatpush1.bf16.msra.mxu0 0
    %400 = vmatprep.mubr.bf16.mxu0 0
    %401 = vmatmul.mubr.bf16.gmra.mrb[0].mxu0 %v269
    %v402 = vpop.f32.mrb[0].mxu0
    %v403 = vadd.f32 %v90, %v402
    %v404 = vpop.f32.mrb[0].mxu0
    %v405 = vpop.f32.mrb[0].mxu0
    %v406 = vadd.f32 %v90, %v405
    %v407 = vpop.f32.mrb[0].mxu0
    %408 = vmatprep.mubr.bf16.mxu0 0
    %409 = vmatmul.mubr.bf16.gmra.mrb[0].mxu0 %v272
    %v410 = vpop.f32.mrb[0].mxu0
    %v411 = vadd.f32 %v90, %v410
    %v412 = vpop.f32.mrb[0].mxu0
    %v413 = vpop.f32.mrb[0].mxu0
    %v414 = vadd.f32 %v90, %v413
    %v415 = vpop.f32.mrb[0].mxu0
    %416 = vmatprep.mubr.bf16.mxu0 0
    %417 = vmatmul.mubr.bf16.gmra.mrb[0].mxu0 %v275
    %v418 = vpop.f32.mrb[0].mxu0
    %v419 = vadd.f32 %v90, %v418
    %v420 = vpop.f32.mrb[0].mxu0
    %v421 = vpop.f32.mrb[0].mxu0
    %v422 = vadd.f32 %v90, %v421
    %v423 = vpop.f32.mrb[0].mxu0
    %424 = vmatprep.mubr.bf16.mxu0 0
    %425 = vmatmul.mubr.bf16.gmra.mrb[0].mxu0 %v278
    %v426 = vpop.f32.mrb[0].mxu0
    %v427 = vadd.f32 %v90, %v426
    %v428 = vpop.f32.mrb[0].mxu0
    %v429 = vpop.f32.mrb[0].mxu0
    %v430 = vadd.f32 %v90, %v429
    %v431 = vpop.f32.mrb[0].mxu0
    %432 = vmatprep.mubr.bf16.mxu0 0
    %433 = vmatmul.mubr.bf16.gmra.mrb[0].mxu0 %v281
    %v434 = vpop.f32.mrb[0].mxu0
    %v435 = vadd.f32 %v90, %v434
    %v436 = vpop.f32.mrb[0].mxu0
    %v437 = vpop.f32.mrb[0].mxu0
    %v438 = vadd.f32 %v90, %v437
    %v439 = vpop.f32.mrb[0].mxu0
    %440 = vmatprep.mubr.bf16.mxu0 0
    %441 = vmatmul.mubr.bf16.gmra.mrb[0].mxu0 %v284
    %v442 = vpop.f32.mrb[0].mxu0
    %v443 = vadd.f32 %v90, %v442
    %v444 = vpop.f32.mrb[0].mxu0
    %v445 = vpop.f32.mrb[0].mxu0
    %v446 = vadd.f32 %v90, %v445
    %v447 = vpop.f32.mrb[0].mxu0
    %448 = vmatprep.mubr.bf16.mxu0 0
    %449 = vmatmul.mubr.bf16.gmra.mrb[0].mxu0 %v287
    %v450 = vpop.f32.mrb[0].mxu0
    %v451 = vadd.f32 %v90, %v450
    %v452 = vpop.f32.mrb[0].mxu0
    %v453 = vpop.f32.mrb[0].mxu0
    %v454 = vadd.f32 %v90, %v453
    %v455 = vpop.f32.mrb[0].mxu0
    %456 = vmatprep.mubr.bf16.mxu0 0
    %457 = vmatmul.mubr.bf16.gmra.mrb[0].mxu0 %v290
    %v458 = vpop.f32.mrb[0].mxu0
    %v459 = vadd.f32 %v90, %v458
    %v460 = vpop.f32.mrb[0].mxu0
    %v461 = vpop.f32.mrb[0].mxu0
    %v462 = vadd.f32 %v90, %v461
    %v463 = vpop.f32.mrb[0].mxu0
    %464 = vmatprep.mubr.bf16.mxu0 0
    %465 = vmatmul.mubr.bf16.gmra.mrb[0].mxu0 %v293
    %v466 = vpop.f32.mrb[0].mxu0
    %v467 = vadd.f32 %v90, %v466
    %v468 = vpop.f32.mrb[0].mxu0
    %v469 = vpop.f32.mrb[0].mxu0
    %v470 = vadd.f32 %v90, %v469
    %v471 = vpop.f32.mrb[0].mxu0
    %472 = vmatprep.mubr.bf16.mxu0 0
    %473 = vmatmul.mubr.bf16.gmra.mrb[0].mxu0 %v296
    %v474 = vpop.f32.mrb[0].mxu0
    %v475 = vadd.f32 %v90, %v474
    %v476 = vpop.f32.mrb[0].mxu0
    %v477 = vpop.f32.mrb[0].mxu0
    %v478 = vadd.f32 %v90, %v477
    %v479 = vpop.f32.mrb[0].mxu0
    %480 = vmatprep.mubr.bf16.mxu0 0
    %481 = vmatmul.mubr.bf16.gmra.mrb[0].mxu0 %v299
    %v482 = vpop.f32.mrb[0].mxu0
    %v483 = vadd.f32 %v90, %v482
    %v484 = vpop.f32.mrb[0].mxu0
    %v485 = vpop.f32.mrb[0].mxu0
    %v486 = vadd.f32 %v90, %v485
    %v487 = vpop.f32.mrb[0].mxu0
    %488 = vmatprep.mubr.bf16.mxu0 0
    %489 = vmatmul.mubr.bf16.gmra.mrb[0].mxu0 %v302
    %v490 = vpop.f32.mrb[0].mxu0
    %v491 = vadd.f32 %v90, %v490
    %v492 = vpop.f32.mrb[0].mxu0
    %v493 = vpop.f32.mrb[0].mxu0
    %v494 = vadd.f32 %v90, %v493
    %v495 = vpop.f32.mrb[0].mxu0
    %496 = vmatprep.mubr.bf16.mxu0 0
    %497 = vmatmul.mubr.bf16.gmra.mrb[0].mxu0 %v305
    %v498 = vpop.f32.mrb[0].mxu0
    %v499 = vadd.f32 %v90, %v498
    %v500 = vpop.f32.mrb[0].mxu0
    %v501 = vpop.f32.mrb[0].mxu0
    %v502 = vadd.f32 %v90, %v501
    %v503 = vpop.f32.mrb[0].mxu0
    %504 = vmatprep.mubr.bf16.mxu0 0
    %505 = vmatmul.mubr.bf16.gmra.mrb[0].mxu0 %v308
    %v506 = vpop.f32.mrb[0].mxu0
    %v507 = vadd.f32 %v90, %v506
    %v508 = vpop.f32.mrb[0].mxu0
    %v509 = vpop.f32.mrb[0].mxu0
    %v510 = vadd.f32 %v90, %v509
    %v511 = vpop.f32.mrb[0].mxu0
    %512 = vmatprep.mubr.bf16.mxu0 0
    %513 = vmatmul.mubr.bf16.gmra.mrb[0].mxu0 %v311
    %v514 = vpop.f32.mrb[0].mxu0
    %v515 = vadd.f32 %v90, %v514
    %v516 = vpop.f32.mrb[0].mxu0
    %v517 = vpop.f32.mrb[0].mxu0
    %v518 = vadd.f32 %v90, %v517
    %v519 = vpop.f32.mrb[0].mxu0
    %520 = vmatprep.mubr.bf16.mxu0 0
    %521 = vmatmul.mubr.bf16.gmra.mrb[0].mxu0 %v314
    %v522 = vpop.f32.mrb[0].mxu0
    %v523 = vadd.f32 %v90, %v522
    %v524 = vpop.f32.mrb[0].mxu0
    %v525 = vpop.f32.mrb[0].mxu0
    %v526 = vadd.f32 %v90, %v525
    %v527 = vpop.f32.mrb[0].mxu0
    %528 = vmatprep.mubr.bf16.mxu0 0
    %529 = vmatmul.mubr.bf16.gmra.mrb[0].mxu0 %v317
    %v530 = vpop.f32.mrb[0].mxu0
    %v531 = vadd.f32 %v90, %v530
    %v532 = vpop.f32.mrb[0].mxu0
    %v533 = vpop.f32.mrb[0].mxu0
    %v534 = vadd.f32 %v90, %v533
    %v535 = vpop.f32.mrb[0].mxu0
    %536 = vmatprep.mubr.bf16.mxu0 0
    %537 = vmatmul.mubr.bf16.gmra.mrb[0].mxu0 %v320
    %v538 = vpop.f32.mrb[0].mxu0
    %v539 = vadd.f32 %v90, %v538
    %v540 = vpop.f32.mrb[0].mxu0
    %v541 = vpop.f32.mrb[0].mxu0
    %v542 = vadd.f32 %v90, %v541
    %v543 = vpop.f32.mrb[0].mxu0
    %544 = vmatprep.mubr.bf16.mxu0 0
    %545 = vmatmul.mubr.bf16.gmra.mrb[0].mxu0 %v323
    %v546 = vpop.f32.mrb[0].mxu0
    %v547 = vadd.f32 %v90, %v546
    %v548 = vpop.f32.mrb[0].mxu0
    %v549 = vpop.f32.mrb[0].mxu0
    %v550 = vadd.f32 %v90, %v549
    %v551 = vpop.f32.mrb[0].mxu0
    %552 = vmatprep.mubr.bf16.mxu0 0
    %553 = vmatmul.mubr.bf16.gmra.mrb[0].mxu0 %v326
    %v554 = vpop.f32.mrb[0].mxu0
    %v555 = vadd.f32 %v90, %v554
    %v556 = vpop.f32.mrb[0].mxu0
    %v557 = vpop.f32.mrb[0].mxu0
    %v558 = vadd.f32 %v90, %v557
    %v559 = vpop.f32.mrb[0].mxu0
    %560 = vmatprep.mubr.bf16.mxu0 0
    %561 = vmatmul.mubr.bf16.gmra.mrb[0].mxu0 %v329
    %v562 = vpop.f32.mrb[0].mxu0
    %v563 = vadd.f32 %v90, %v562
    %v564 = vpop.f32.mrb[0].mxu0
    %v565 = vpop.f32.mrb[0].mxu0
    %v566 = vadd.f32 %v90, %v565
    %v567 = vpop.f32.mrb[0].mxu0
    %568 = vmatprep.mubr.bf16.mxu0 0
    %569 = vmatmul.mubr.bf16.gmra.mrb[0].mxu0 %v332
    %v570 = vpop.f32.mrb[0].mxu0
    %v571 = vadd.f32 %v90, %v570
    %v572 = vpop.f32.mrb[0].mxu0
    %v573 = vpop.f32.mrb[0].mxu0
    %v574 = vadd.f32 %v90, %v573
    %v575 = vpop.f32.mrb[0].mxu0
    %576 = vmatprep.mubr.bf16.mxu0 0
    %577 = vmatmul.mubr.bf16.gmra.mrb[0].mxu0 %v335
    %v578 = vpop.f32.mrb[0].mxu0
    %v579 = vadd.f32 %v90, %v578
    %v580 = vpop.f32.mrb[0].mxu0
    %v581 = vpop.f32.mrb[0].mxu0
    %v582 = vadd.f32 %v90, %v581
    %v583 = vpop.f32.mrb[0].mxu0
    %584 = vmatprep.mubr.bf16.mxu0 0
    %585 = vmatmul.mubr.bf16.gmra.mrb[0].mxu0 %v338
    %v586 = vpop.f32.mrb[0].mxu0
    %v587 = vadd.f32 %v90, %v586
    %v588 = vpop.f32.mrb[0].mxu0
    %v589 = vpop.f32.mrb[0].mxu0
    %v590 = vadd.f32 %v90, %v589
    %v591 = vpop.f32.mrb[0].mxu0
    %592 = vmatprep.mubr.bf16.mxu0 0
    %593 = vmatmul.mubr.bf16.gmra.mrb[0].mxu0 %v341
    %v594 = vpop.f32.mrb[0].mxu0
    %v595 = vadd.f32 %v90, %v594
    %v596 = vpop.f32.mrb[0].mxu0
    %v597 = vpop.f32.mrb[0].mxu0
    %v598 = vadd.f32 %v90, %v597
    %v599 = vpop.f32.mrb[0].mxu0
    %600 = vmatprep.mubr.bf16.mxu0 0
    %601 = vmatmul.mubr.bf16.gmra.mrb[0].mxu0 %v344
    %v602 = vpop.f32.mrb[0].mxu0
    %v603 = vadd.f32 %v90, %v602
    %v604 = vpop.f32.mrb[0].mxu0
    %v605 = vpop.f32.mrb[0].mxu0
    %v606 = vadd.f32 %v90, %v605
    %v607 = vpop.f32.mrb[0].mxu0
    %608 = vmatprep.mubr.bf16.mxu0 0
    %609 = vmatmul.mubr.bf16.gmra.mrb[0].mxu0 %v347
    %v610 = vpop.f32.mrb[0].mxu0
    %v611 = vadd.f32 %v90, %v610
    %v612 = vpop.f32.mrb[0].mxu0
    %v613 = vpop.f32.mrb[0].mxu0
    %v614 = vadd.f32 %v90, %v613
    %v615 = vpop.f32.mrb[0].mxu0
    %616 = vmatprep.mubr.bf16.mxu0 0
    %617 = vmatmul.mubr.bf16.gmra.mrb[0].mxu0 %v350
    %v618 = vpop.f32.mrb[0].mxu0
    %v619 = vadd.f32 %v90, %v618
    %v620 = vpop.f32.mrb[0].mxu0
    %v621 = vpop.f32.mrb[0].mxu0
    %v622 = vadd.f32 %v90, %v621
    %v623 = vpop.f32.mrb[0].mxu0
    %624 = vmatprep.mubr.bf16.mxu0 0
    %625 = vmatmul.mubr.bf16.gmra.mrb[0].mxu0 %v353
    %v626 = vpop.f32.mrb[0].mxu0
    %v627 = vadd.f32 %v90, %v626
    %v628 = vpop.f32.mrb[0].mxu0
    %v629 = vpop.f32.mrb[0].mxu0
    %v630 = vadd.f32 %v90, %v629
    %v631 = vpop.f32.mrb[0].mxu0
    %632 = vmatprep.mubr.bf16.mxu0 0
    %633 = vmatmul.mubr.bf16.gmra.mrb[0].mxu0 %v356
    %v634 = vpop.f32.mrb[0].mxu0
    %v635 = vadd.f32 %v90, %v634
    %v636 = vpop.f32.mrb[0].mxu0
    %v637 = vpop.f32.mrb[0].mxu0
    %v638 = vadd.f32 %v90, %v637
    %v639 = vpop.f32.mrb[0].mxu0
    %640 = vmatprep.mubr.bf16.mxu0 0
    %641 = vmatmul.mubr.bf16.gmra.mrb[0].mxu0 %v359
    %v642 = vpop.f32.mrb[0].mxu0
    %v643 = vadd.f32 %v90, %v642
    %v644 = vpop.f32.mrb[0].mxu0
    %v645 = vpop.f32.mrb[0].mxu0
    %v646 = vadd.f32 %v90, %v645
    %v647 = vpop.f32.mrb[0].mxu0
    %648 = vmatprep.mubr.bf16.mxu0 0
    %649 = vmatmul.mubr.bf16.gmra.mrb[0].mxu0 %v362
    %v650 = vpop.f32.mrb[0].mxu0
    %v651 = vadd.f32 %v90, %v650
    %v652 = vpop.f32.mrb[0].mxu0
    %v653 = vpop.f32.mrb[0].mxu0
    %v654 = vadd.f32 %v90, %v653
    %v655 = vpop.f32.mrb[0].mxu0
    %656 = vdwg.mxu0
    %657 = vst [vmem:[#allocation2] sm:$0xff] %v403
    %658 = vst [vmem:[#allocation2 + $0x8] sm:$0xff] %v406
    %659 = vst [vmem:[#allocation2 + $0x10] sm:$0xff] %v411
    %660 = vst [vmem:[#allocation2 + $0x18] sm:$0xff] %v414
    %661 = vst [vmem:[#allocation2 + $0x20] sm:$0xff] %v419
    %662 = vst [vmem:[#allocation2 + $0x28] sm:$0xff] %v422
    %663 = vst [vmem:[#allocation2 + $0x30] sm:$0xff] %v427
    %664 = vst [vmem:[#allocation2 + $0x38] sm:$0xff] %v430
    %665 = vst [vmem:[#allocation2 + $0x40] sm:$0xff] %v435
    %666 = vst [vmem:[#allocation2 + $0x48] sm:$0xff] %v438
    %667 = vst [vmem:[#allocation2 + $0x50] sm:$0xff] %v443
    %668 = vst [vmem:[#allocation2 + $0x58] sm:$0xff] %v446
    %669 = vst [vmem:[#allocation2 + $0x60] sm:$0xff] %v451
    %670 = vst [vmem:[#allocation2 + $0x68] sm:$0xff] %v454
    %671 = vst [vmem:[#allocation2 + $0x70] sm:$0xff] %v459
    %672 = vst [vmem:[#allocation2 + $0x78] sm:$0xff] %v462
    %673 = vst [vmem:[#allocation2 + $0x80] sm:$0xff] %v467
    %674 = vst [vmem:[#allocation2 + $0x88] sm:$0xff] %v470
    %675 = vst [vmem:[#allocation2 + $0x90] sm:$0xff] %v475
    %676 = vst [vmem:[#allocation2 + $0x98] sm:$0xff] %v478
    %677 = vst [vmem:[#allocation2 + $0xa0] sm:$0xff] %v483
    %678 = vst [vmem:[#allocation2 + $0xa8] sm:$0xff] %v486
    %679 = vst [vmem:[#allocation2 + $0xb0] sm:$0xff] %v491
    %680 = vst [vmem:[#allocation2 + $0xb8] sm:$0xff] %v494
    %681 = vst [vmem:[#allocation2 + $0xc0] sm:$0xff] %v499
    %682 = vst [vmem:[#allocation2 + $0xc8] sm:$0xff] %v502
    %683 = vst [vmem:[#allocation2 + $0xd0] sm:$0xff] %v507
    %684 = vst [vmem:[#allocation2 + $0xd8] sm:$0xff] %v510
    %685 = vst [vmem:[#allocation2 + $0xe0] sm:$0xff] %v515
    %686 = vst [vmem:[#allocation2 + $0xe8] sm:$0xff] %v518
    %687 = vst [vmem:[#allocation2 + $0xf0] sm:$0xff] %v523
    %688 = vst [vmem:[#allocation2 + $0xf8] sm:$0xff] %v526
    %689 = vst [vmem:[#allocation2 + $0x100] sm:$0xff] %v531
    %690 = vst [vmem:[#allocation2 + $0x108] sm:$0xff] %v534
    %691 = vst [vmem:[#allocation2 + $0x110] sm:$0xff] %v539
    %692 = vst [vmem:[#allocation2 + $0x118] sm:$0xff] %v542
    %693 = vst [vmem:[#allocation2 + $0x120] sm:$0xff] %v547
    %694 = vst [vmem:[#allocation2 + $0x128] sm:$0xff] %v550
    %695 = vst [vmem:[#allocation2 + $0x130] sm:$0xff] %v555
    %696 = vst [vmem:[#allocation2 + $0x138] sm:$0xff] %v558
    %697 = vst [vmem:[#allocation2 + $0x140] sm:$0xff] %v563
    %698 = vst [vmem:[#allocation2 + $0x148] sm:$0xff] %v566
    %699 = vst [vmem:[#allocation2 + $0x150] sm:$0xff] %v571
    %700 = vst [vmem:[#allocation2 + $0x158] sm:$0xff] %v574
    %701 = vst [vmem:[#allocation2 + $0x160] sm:$0xff] %v579
    %702 = vst [vmem:[#allocation2 + $0x168] sm:$0xff] %v582
    %703 = vst [vmem:[#allocation2 + $0x170] sm:$0xff] %v587
    %704 = vst [vmem:[#allocation2 + $0x178] sm:$0xff] %v590
    %705 = vst [vmem:[#allocation2 + $0x180] sm:$0xff] %v595
    %706 = vst [vmem:[#allocation2 + $0x188] sm:$0xff] %v598
    %707 = vst [vmem:[#allocation2 + $0x190] sm:$0xff] %v603
    %708 = vst [vmem:[#allocation2 + $0x198] sm:$0xff] %v606
    %709 = vst [vmem:[#allocation2 + $0x1a0] sm:$0xff] %v611
    %710 = vst [vmem:[#allocation2 + $0x1a8] sm:$0xff] %v614
    %711 = vst [vmem:[#allocation2 + $0x1b0] sm:$0xff] %v619
    %712 = vst [vmem:[#allocation2 + $0x1b8] sm:$0xff] %v622
    %713 = vst [vmem:[#allocation2 + $0x1c0] sm:$0xff] %v627
    %714 = vst [vmem:[#allocation2 + $0x1c8] sm:$0xff] %v630
    %715 = vst [vmem:[#allocation2 + $0x1d0] sm:$0xff] %v635
    %716 = vst [vmem:[#allocation2 + $0x1d8] sm:$0xff] %v638
    %717 = vst [vmem:[#allocation2 + $0x1e0] sm:$0xff] %v643
    %718 = vst [vmem:[#allocation2 + $0x1e8] sm:$0xff] %v646
    %719 = vst [vmem:[#allocation2 + $0x1f0] sm:$0xff] %v651
    %720 = vst [vmem:[#allocation2 + $0x1f8] sm:$0xff] %v654
    // Predicated region
    $region14: #{tpu_custom_call.1} parent=1 // pred_check
      _
    $region15: #{tpu_custom_call.1} parent=1 // pred_check_branch
      %722 = sbr.rel (0) target = $region17
    $region16: #{tpu_custom_call.1} parent=1 // pred_region
      %s724 = ssub.s32 8192, 8192
      %725 = vsyncadd [#allocation3], %s724
      %s726 = sshll.u32 [#allocation2], 4
      %s727 = int_to_ptr.vmem [resolvable:$true] %s726
      %732 = dma.vmem_to_hbm [thread:$0]  %s727, 8192, %s3, [#allocation3], 128, 128, 8
    $region17: #{tpu_custom_call.1} parent=1 // pred_fallthru
      _
    // Predicated region
    $region18: #{tpu_custom_call.1} parent=1 // pred_check
      _
    $region19: #{tpu_custom_call.1} parent=1 // pred_check_branch
      %734 = sbr.rel (0) target = $region21
    $region20: #{tpu_custom_call.1} parent=1 // pred_region
      %735 = dma.done [#allocation3], 8192
    $region21: #{tpu_custom_call.1} parent=1 // pred_fallthru
      _
    %736 = vsyncpa [#allocation3], 1

</llo_original>
